<compile_context>
chip_gen: v7x
topology: tpu7x:2x2x1
jax: 0.10.0
libtpu: 0.0.40
codegen_flags: <defaults>
</compile_context>

<pallas_src>
import math

import jax
import jax.numpy as jnp
from jax.experimental import pallas as pl
from jax.experimental.pallas import tpu as pltpu

_MAX_BATCH_TILE = 2048   # multiple of 256; sized for v7x's 64 MiB VMEM, fine on v5e/v6e


# ----------------------------- Pallas kernel --------------------------------

def _make_fused_mlp_kernel(n_layers):
    """Fused MLP over one batch tile: (n_layers - 1) x (matmul + bias + relu), then
    matmul + bias + log_softmax.  Weights/biases are VMEM-resident; intermediate
    activations never touch HBM."""

    def kernel(*refs):
        x_ref = refs[0]
        o_ref = refs[-1]
        wb_refs = refs[1:-1]                 # interleaved (W0, b0, W1, b1, ...)

        h = x_ref[...].astype(jnp.float32)   # (Bt, D_in) f32
        for i in range(n_layers):            # static unroll at trace time
            w = wb_refs[2 * i][...]          # (D_in_i, D_out_i) bf16
            b = wb_refs[2 * i + 1][...]      # (1, D_out_i)      f32 -> broadcasts
            # bf16 operands feed the MXU natively; accumulate in f32.
            z = jnp.dot(h.astype(jnp.bfloat16), w,
                        preferred_element_type=jnp.float32) + b
            if i < n_layers - 1:
                h = jnp.maximum(z, 0.0)      # relu, f32 on the VPU
            else:
                # numerically stable log_softmax over the (real, unpadded) classes
                m = jnp.max(z, axis=-1, keepdims=True)
                s = z - m
                lse = jnp.log(jnp.sum(jnp.exp(s), axis=-1, keepdims=True))
                h = s - lse
        o_ref[...] = h.astype(o_ref.dtype)

    return kernel


# ----------------------------- Wrappers --------------------------------------

def prepare_params(params):
    """One-time param prep: weights -> bf16 (MXU-native), biases -> f32 row vectors
    (1, D_out).  No shape padding — all dims stay at their natural sizes."""
    prepped = []
    for w, b in params:
        prepped.append((jnp.asarray(w, jnp.bfloat16),
                        jnp.asarray(b, jnp.float32).reshape(1, -1)))
    return prepped


@jax.jit
def neural_network_forward(x, prepped_params):
    """x: (B, in_features) f32.  prepped_params: output of prepare_params.
    Returns log_softmax logits of shape (B, num_classes), f32."""
    n_layers = len(prepped_params)
    B, d_in = x.shape
    num_classes = prepped_params[-1][0].shape[1]

    # Batch tile: whole batch if small (full-dim block, exempt from the (8,128) rule),
    # otherwise a 2048-row tile streamed & double-buffered across the grid.
    bt = B if B <= _MAX_BATCH_TILE else _MAX_BATCH_TILE
    grid = (pl.cdiv(B, bt),)

    flat = []
    in_specs = [pl.BlockSpec((bt, d_in), lambda i: (i, 0))]
    for w, b in prepped_params:
        flat += [w, b]
        # Constant index_map -> single DMA; weights/biases stay VMEM-resident.
        in_specs.append(pl.BlockSpec(w.shape, lambda i: (0, 0)))
        in_specs.append(pl.BlockSpec(b.shape, lambda i: (0, 0)))

    flops = 2 * B * sum(int(w.shape[0]) * int(w.shape[1]) for w, _ in prepped_params)
    bytes_accessed = (
        x.size * x.dtype.itemsize + B * num_classes * 4
        + sum(w.size * w.dtype.itemsize + b.size * b.dtype.itemsize
              for w, b in prepped_params))
    cost = pl.CostEstimate(flops=int(flops),
                           transcendentals=int(B * (num_classes + 1)),
                           bytes_accessed=int(bytes_accessed))

    return pl.pallas_call(
        _make_fused_mlp_kernel(n_layers),
        out_shape=jax.ShapeDtypeStruct((B, num_classes), jnp.float32),
        grid=grid,
        in_specs=in_specs,
        out_specs=pl.BlockSpec((bt, num_classes), lambda i: (i, 0)),
        compiler_params=pltpu.CompilerParams(
            dimension_semantics=("parallel",)),   # both TCs on v7x; no-op on v5e/v6e
        cost_estimate=cost,
    )(x, *flat)


def init_params(layers, key):
    """Deterministic init mirroring torch.randn(in, out) * sqrt(0.1)."""
    params = []
    scale = math.sqrt(0.1)
    for i in range(len(layers) - 1):
        key, kw, kb = jax.random.split(key, 3)
        w = jax.random.normal(kw, (layers[i], layers[i + 1]), jnp.float32) * scale
        b = jax.random.normal(kb, (layers[i + 1],), jnp.float32) * scale
        params.append((w, b))
    return params


# ----------------------------- Main ------------------------------------------

if __name__ == "__main__":
    key = jax.random.PRNGKey(0)
    key, kx = jax.random.split(key)

    # layers = [input_dim, hidden, hidden, num_classes]
    layers = [32, 64, 64, 16]
    batch = 8

    params = init_params(layers, key)
    x = jax.random.normal(kx, (batch, layers[0]), jnp.float32)

    prepped = prepare_params(params)
    out = neural_network_forward(x, prepped)
    out = jax.block_until_ready(out)

    # Reference in plain JAX at matched precision (bf16 matmul operands, f32 accum).
    ref = x
    for li, (w, b) in enumerate(params):
        z = jnp.dot(ref.astype(jnp.bfloat16), w.astype(jnp.bfloat16),
                    preferred_element_type=jnp.float32) + b
        if li < len(params) - 1:
            ref = jnp.maximum(z, 0.0)
        else:
            ref = jax.nn.log_softmax(z, axis=1)

    assert out.shape == (batch, layers[-1])
    assert bool(jnp.all(jnp.isfinite(out)))
    assert bool(jnp.allclose(out, ref, atol=2e-3, rtol=2e-3))
    # log_softmax rows should exponentiate-sum to 1
    assert bool(jnp.allclose(jnp.sum(jnp.exp(out), axis=1), 1.0, atol=1e-3))

    print("KERNEL_OK")
</pallas_src>

<mosaic_0001>
module attributes {stable_mosaic.version = 11 : i64} {
  func.func @kernel(%arg0: i32, %arg1: memref<8x32xf32, #tpu.memory_space<vmem>>, %arg2: memref<32x64xbf16, #tpu.memory_space<vmem>>, %arg3: memref<1x64xf32, #tpu.memory_space<vmem>>, %arg4: memref<64x64xbf16, #tpu.memory_space<vmem>>, %arg5: memref<1x64xf32, #tpu.memory_space<vmem>>, %arg6: memref<64x16xbf16, #tpu.memory_space<vmem>>, %arg7: memref<1x16xf32, #tpu.memory_space<vmem>>, %arg8: memref<8x16xf32, #tpu.memory_space<vmem>>) attributes {dimension_semantics = [#tpu.dimension_semantics<parallel>], iteration_bounds = array<i64: 1>, scalar_prefetch = 0 : i64, scratch_operands = 0 : i64, tpu.core_type = #tpu.core_type<tc>, window_params = [{transform_indices = @transform_0, window_bounds = array<i64: 8, 32>}, {pipeline_mode = #tpu.pipeline_mode<synchronous>, transform_indices = @transform_1, window_bounds = array<i64: 32, 64>}, {pipeline_mode = #tpu.pipeline_mode<synchronous>, transform_indices = @transform_2, window_bounds = array<i64: 1, 64>}, {pipeline_mode = #tpu.pipeline_mode<synchronous>, transform_indices = @transform_3, window_bounds = array<i64: 64, 64>}, {pipeline_mode = #tpu.pipeline_mode<synchronous>, transform_indices = @transform_4, window_bounds = array<i64: 1, 64>}, {pipeline_mode = #tpu.pipeline_mode<synchronous>, transform_indices = @transform_5, window_bounds = array<i64: 64, 16>}, {pipeline_mode = #tpu.pipeline_mode<synchronous>, transform_indices = @transform_6, window_bounds = array<i64: 1, 16>}, {transform_indices = @transform_7, window_bounds = array<i64: 8, 16>}]} {
    %c0 = arith.constant 0 : index
    %c0_0 = arith.constant 0 : index
    %0 = vector.load %arg1[%c0, %c0_0] : memref<8x32xf32, #tpu.memory_space<vmem>>, vector<8x32xf32>
    %c0_1 = arith.constant 0 : index
    %c0_2 = arith.constant 0 : index
    %1 = vector.load %arg2[%c0_1, %c0_2] : memref<32x64xbf16, #tpu.memory_space<vmem>>, vector<32x64xbf16>
    %c0_3 = arith.constant 0 : index
    %c0_4 = arith.constant 0 : index
    %2 = vector.load %arg3[%c0_3, %c0_4] : memref<1x64xf32, #tpu.memory_space<vmem>>, vector<1x64xf32>
    %3 = arith.truncf %0 : vector<8x32xf32> to vector<8x32xbf16>
    %cst = arith.constant dense<0.000000e+00> : vector<8x64xf32>
    %4 = tpu.matmul %3, %1, %cst {dimension_numbers = #tpu.dot_dimension_numbers<[1], [0], [0], [1], [0, 0, 1, 1], [], []>} : vector<8x32xbf16>, vector<32x64xbf16>, vector<8x64xf32> -> vector<8x64xf32>
    %5 = vector.broadcast %2 : vector<1x64xf32> to vector<8x64xf32>
    %6 = arith.addf %4, %5 : vector<8x64xf32>
    %cst_5 = arith.constant 0.000000e+00 : f32
    %7 = vector.broadcast %cst_5 : f32 to vector<8x64xf32>
    %8 = arith.maximumf %6, %7 : vector<8x64xf32>
    %c0_6 = arith.constant 0 : index
    %c0_7 = arith.constant 0 : index
    %9 = vector.load %arg4[%c0_6, %c0_7] : memref<64x64xbf16, #tpu.memory_space<vmem>>, vector<64x64xbf16>
    %c0_8 = arith.constant 0 : index
    %c0_9 = arith.constant 0 : index
    %10 = vector.load %arg5[%c0_8, %c0_9] : memref<1x64xf32, #tpu.memory_space<vmem>>, vector<1x64xf32>
    %11 = arith.truncf %8 : vector<8x64xf32> to vector<8x64xbf16>
    %cst_10 = arith.constant dense<0.000000e+00> : vector<8x64xf32>
    %12 = tpu.matmul %11, %9, %cst_10 {dimension_numbers = #tpu.dot_dimension_numbers<[1], [0], [0], [1], [0, 0, 1, 1], [], []>} : vector<8x64xbf16>, vector<64x64xbf16>, vector<8x64xf32> -> vector<8x64xf32>
    %13 = vector.broadcast %10 : vector<1x64xf32> to vector<8x64xf32>
    %14 = arith.addf %12, %13 : vector<8x64xf32>
    %cst_11 = arith.constant 0.000000e+00 : f32
    %15 = vector.broadcast %cst_11 : f32 to vector<8x64xf32>
    %16 = arith.maximumf %14, %15 : vector<8x64xf32>
    %c0_12 = arith.constant 0 : index
    %c0_13 = arith.constant 0 : index
    %17 = vector.load %arg6[%c0_12, %c0_13] : memref<64x16xbf16, #tpu.memory_space<vmem>>, vector<64x16xbf16>
    %c0_14 = arith.constant 0 : index
    %c0_15 = arith.constant 0 : index
    %18 = vector.load %arg7[%c0_14, %c0_15] : memref<1x16xf32, #tpu.memory_space<vmem>>, vector<1x16xf32>
    %19 = arith.truncf %16 : vector<8x64xf32> to vector<8x64xbf16>
    %cst_16 = arith.constant dense<0.000000e+00> : vector<8x16xf32>
    %20 = tpu.matmul %19, %17, %cst_16 {dimension_numbers = #tpu.dot_dimension_numbers<[1], [0], [0], [1], [0, 0, 1, 1], [], []>} : vector<8x64xbf16>, vector<64x16xbf16>, vector<8x16xf32> -> vector<8x16xf32>
    %21 = vector.broadcast %18 : vector<1x16xf32> to vector<8x16xf32>
    %22 = arith.addf %20, %21 : vector<8x16xf32>
    %cst_17 = arith.constant dense<0xFF800000> : vector<8xf32>
    %23 = vector.multi_reduction <maximumf>, %22, %cst_17 [1] : vector<8x16xf32> to vector<8xf32>
    %24 = vector.shape_cast %23 : vector<8xf32> to vector<8x1xf32>
    %25 = vector.broadcast %24 : vector<8x1xf32> to vector<8x16xf32>
    %26 = arith.subf %22, %25 : vector<8x16xf32>
    %27 = math.exp %26 : vector<8x16xf32>
    %cst_18 = arith.constant dense<0.000000e+00> : vector<8xf32>
    %28 = vector.multi_reduction <add>, %27, %cst_18 [1] : vector<8x16xf32> to vector<8xf32>
    %29 = vector.shape_cast %28 : vector<8xf32> to vector<8x1xf32>
    %30 = math.log %29 : vector<8x1xf32>
    %31 = vector.broadcast %30 : vector<8x1xf32> to vector<8x16xf32>
    %32 = arith.subf %26, %31 : vector<8x16xf32>
    %c0_19 = arith.constant 0 : index
    %c0_20 = arith.constant 0 : index
    %33 = vector.load %arg8[%c0_19, %c0_20] : memref<8x16xf32, #tpu.memory_space<vmem>>, vector<8x16xf32>
    tpu.vector_store %arg8[%c0_19, %c0_20], %32 {strides = array<i32>} : memref<8x16xf32, #tpu.memory_space<vmem>>, vector<8x16xf32>,
    return
  }
  func.func @transform_0(%arg0: i32) -> (i32, i32) {
    %c0_i32 = arith.constant 0 : i32
    %c0_i32_0 = arith.constant 0 : i32
    return %arg0, %c0_i32 : i32, i32
  }
  func.func @transform_1(%arg0: i32) -> (i32, i32) {
    %c0_i32 = arith.constant 0 : i32
    %c0_i32_0 = arith.constant 0 : i32
    %c0_i32_1 = arith.constant 0 : i32
    return %c0_i32, %c0_i32_0 : i32, i32
  }
  func.func @transform_2(%arg0: i32) -> (i32, i32) {
    %c0_i32 = arith.constant 0 : i32
    %c0_i32_0 = arith.constant 0 : i32
    %c0_i32_1 = arith.constant 0 : i32
    return %c0_i32, %c0_i32_0 : i32, i32
  }
  func.func @transform_3(%arg0: i32) -> (i32, i32) {
    %c0_i32 = arith.constant 0 : i32
    %c0_i32_0 = arith.constant 0 : i32
    %c0_i32_1 = arith.constant 0 : i32
    return %c0_i32, %c0_i32_0 : i32, i32
  }
  func.func @transform_4(%arg0: i32) -> (i32, i32) {
    %c0_i32 = arith.constant 0 : i32
    %c0_i32_0 = arith.constant 0 : i32
    %c0_i32_1 = arith.constant 0 : i32
    return %c0_i32, %c0_i32_0 : i32, i32
  }
  func.func @transform_5(%arg0: i32) -> (i32, i32) {
    %c0_i32 = arith.constant 0 : i32
    %c0_i32_0 = arith.constant 0 : i32
    %c0_i32_1 = arith.constant 0 : i32
    return %c0_i32, %c0_i32_0 : i32, i32
  }
  func.func @transform_6(%arg0: i32) -> (i32, i32) {
    %c0_i32 = arith.constant 0 : i32
    %c0_i32_0 = arith.constant 0 : i32
    %c0_i32_1 = arith.constant 0 : i32
    return %c0_i32, %c0_i32_0 : i32, i32
  }
  func.func @transform_7(%arg0: i32) -> (i32, i32) {
    %c0_i32 = arith.constant 0 : i32
    %c0_i32_0 = arith.constant 0 : i32
    return %arg0, %c0_i32 : i32, i32
  }
}

</mosaic_0001>

<llo_original>
// kernel: neural_network_forward.1
$region0: #{neural_network_forward.1}
  #allocation0 [shape = 'u32[]', space=smem, size = 0x4, offset = 0x4, fixed_abs, tag = 'smem constant byte address 0x4 - core index']
  #allocation1 [shape = 'u32[144,128]{1,0:T(1,128)}', space=vmem, size = 0x12000, scoped, tag = 'internal scratch']
  %s0 = inlined_call_operand.hbm [shape: f32[8,32], index: 0, kind: input, shape index: {}]
  %s1 = inlined_call_operand.vmem [shape: bf16[32,64], index: 1, kind: input, shape index: {}]
  %s2 = inlined_call_operand.vmem [shape: f32[1,64], index: 2, kind: input, shape index: {}]
  %s3 = inlined_call_operand.vmem [shape: bf16[64,64], index: 3, kind: input, shape index: {}]
  %s4 = inlined_call_operand.vmem [shape: f32[1,64], index: 4, kind: input, shape index: {}]
  %s5 = inlined_call_operand.vmem [shape: bf16[64,16], index: 5, kind: input, shape index: {}]
  %s6 = inlined_call_operand.vmem [shape: f32[1,16], index: 6, kind: input, shape index: {}]
  %s7 = inlined_call_operand.hbm [shape: f32[8,16], index: 7, kind: output, shape index: {}]
  %s8 = sld [smem:[#allocation0]]
  $region42: #{neural_network_forward.1} parent=0
    _
  %s10 = ssub.s32 1, %s8
  %s11 = scalar_select 0, %s10, %s8
  $region1: #{neural_network_forward.1} parent=0
    #allocation2 [shape = 'u8[4096]{0}', space=vmem, size = 0x1000, scoped, tag = 'input window, operand 0, single buffered']
    #allocation3 [shape = 's32[1]{0}', space=sflag, size = 0x4, scoped, tag = 'scoped memory for neural_network_forward.1']
    #allocation4 [shape = 's32[1]{0}', space=sflag, size = 0x4, scoped, tag = 'scoped memory for neural_network_forward.1']
    #allocation5 [shape = 'u8[4096]{0}', space=vmem, size = 0x1000, scoped, tag = 'output window, operand 0, single buffered']
    %12 = vsyncpa [#allocation3], 0
    %13 = vsyncpa [#allocation4], 0
    // Predicated region
    $region2: #{neural_network_forward.1} parent=1 // pred_check
      _
    $region3: #{neural_network_forward.1} parent=1 // pred_check_branch
      %15 = sbr.rel (0) target = $region5
    $region4: #{neural_network_forward.1} parent=1 // pred_region
      %s17 = ssub.s32 128, 128
      %18 = vsyncadd [#allocation3], %s17
      %s20 = sshll.u32 [#allocation2], 4
      %s21 = int_to_ptr.vmem [resolvable:$true] %s20
      %23 = dma.hbm_to_vmem [thread:$0]  %s0, 128, %s21, [#allocation3]
    $region5: #{neural_network_forward.1} parent=1 // pred_fallthru
      _
    // Predicated region
    $region6: #{neural_network_forward.1} parent=1 // pred_check
      _
    $region7: #{neural_network_forward.1} parent=1 // pred_check_branch
      %25 = sbr.rel (0) target = $region9
    $region8: #{neural_network_forward.1} parent=1 // pred_region
      _
    $region9: #{neural_network_forward.1} parent=1 // pred_fallthru
      _
    // Predicated region
    $region10: #{neural_network_forward.1} parent=1 // pred_check
      _
    $region11: #{neural_network_forward.1} parent=1 // pred_check_branch
      %27 = sbr.rel (0) target = $region13
    $region12: #{neural_network_forward.1} parent=1 // pred_region
      _
    $region13: #{neural_network_forward.1} parent=1 // pred_fallthru
      _
    // Predicated region
    $region14: #{neural_network_forward.1} parent=1 // pred_check
      _
    $region15: #{neural_network_forward.1} parent=1 // pred_check_branch
      %29 = sbr.rel (0) target = $region17
    $region16: #{neural_network_forward.1} parent=1 // pred_region
      _
    $region17: #{neural_network_forward.1} parent=1 // pred_fallthru
      _
    // Predicated region
    $region18: #{neural_network_forward.1} parent=1 // pred_check
      _
    $region19: #{neural_network_forward.1} parent=1 // pred_check_branch
      %31 = sbr.rel (0) target = $region21
    $region20: #{neural_network_forward.1} parent=1 // pred_region
      _
    $region21: #{neural_network_forward.1} parent=1 // pred_fallthru
      _
    // Predicated region
    $region22: #{neural_network_forward.1} parent=1 // pred_check
      _
    $region23: #{neural_network_forward.1} parent=1 // pred_check_branch
      %33 = sbr.rel (0) target = $region25
    $region24: #{neural_network_forward.1} parent=1 // pred_region
      _
    $region25: #{neural_network_forward.1} parent=1 // pred_fallthru
      _
    // Predicated region
    $region26: #{neural_network_forward.1} parent=1 // pred_check
      _
    $region27: #{neural_network_forward.1} parent=1 // pred_check_branch
      %35 = sbr.rel (0) target = $region29
    $region28: #{neural_network_forward.1} parent=1 // pred_region
      _
    $region29: #{neural_network_forward.1} parent=1 // pred_fallthru
      _
    // Predicated region
    $region30: #{neural_network_forward.1} parent=1 // pred_check
      _
    $region31: #{neural_network_forward.1} parent=1 // pred_check_branch
      %37 = sbr.rel (0) target = $region33
    $region32: #{neural_network_forward.1} parent=1 // pred_region
      %38 = dma.done [#allocation3], 128
    $region33: #{neural_network_forward.1} parent=1 // pred_fallthru
      _
    %v40 = vld [vmem:[#allocation2] sm:$0xff]
    %v41 = vld [vmem:[%s1] sm:$0xf]
    %v42 = vld [vmem:[%s1 + $0x4] sm:$0xf]
    %v43 = vld [vmem:[%s1 + $0x8] sm:$0xf]
    %v44 = vld [vmem:[%s1 + $0xc] sm:$0xf]
    %v45 = vld [vmem:[%s2] sm:$0x1]
    %v46 = vpack.c.bf16 %v40, %v40
    %v48 = vlaneseq
    %v49 = vshrl.u32 %v48, 7
    %v50 = vsub.s32 0, %v49
    %v51 = vrot.slane %v45, %v50
    %v57 = vunpack.c.l.b16 %v41
    %v58 = vunpack.c.l.b16 %v42
    %v59 = vunpack.c.l.b16 %v43
    %v60 = vunpack.c.l.b16 %v44
    %v61 = vpack.c.b16 %v58, %v57
    %v62 = vpack.c.b16 %v60, %v59
    %vm65 = vcmask 261120
    %v67 = vsel %vm65, %v46, 0
    %69 = vmatprep.subr.bf16.mxu0 0
    %70 = vmatpush1.bf16.msra.mxu0 %v61
    %71 = vmatprep.subr.bf16.mxu0 0
    %72 = vmatpush1.bf16.msra.mxu0 %v62
    %73 = vmatprep.subr.bf16.mxu0 0
    %74 = vmatpush1.bf16.msra.mxu0 0
    %75 = vmatprep.subr.bf16.mxu0 0
    %76 = vmatpush1.bf16.msra.mxu0 0
    %77 = vmatprep.subr.bf16.mxu0 0
    %78 = vmatpush1.bf16.msra.mxu0 0
    %79 = vmatprep.subr.bf16.mxu0 0
    %80 = vmatpush1.bf16.msra.mxu0 0
    %81 = vmatprep.subr.bf16.mxu0 0
    %82 = vmatpush1.bf16.msra.mxu0 0
    %83 = vmatprep.subr.bf16.mxu0 0
    %84 = vmatpush1.bf16.msra.mxu0 0
    %85 = vmatprep.subr.bf16.mxu0 0
    %86 = vmatpush1.bf16.msra.mxu0 0
    %87 = vmatprep.subr.bf16.mxu0 0
    %88 = vmatpush1.bf16.msra.mxu0 0
    %89 = vmatprep.subr.bf16.mxu0 0
    %90 = vmatpush1.bf16.msra.mxu0 0
    %91 = vmatprep.subr.bf16.mxu0 0
    %92 = vmatpush1.bf16.msra.mxu0 0
    %93 = vmatprep.subr.bf16.mxu0 0
    %94 = vmatpush1.bf16.msra.mxu0 0
    %95 = vmatprep.subr.bf16.mxu0 0
    %96 = vmatpush1.bf16.msra.mxu0 0
    %97 = vmatprep.subr.bf16.mxu0 0
    %98 = vmatpush1.bf16.msra.mxu0 0
    %99 = vmatprep.subr.bf16.mxu0 0
    %100 = vmatpush1.bf16.msra.mxu0 0
    %101 = vmatprep.mubr.bf16.mxu0 0
    %102 = vmatmul.mubr.bf16.gmra.mrb[0].mxu0 %v67
    %v103 = vpop.f32.mrb[0].mxu0
    %v104 = vadd.f32 %v51, %v103
    %v105 = vpop.f32.mrb[0].mxu0
    %v106 = vpop.f32.mrb[0].mxu0
    %v107 = vpop.f32.mrb[0].mxu0
    %108 = vdwg.mxu0
    %v109 = vmax.f32 %v104, 0.0
    %v110 = vld [vmem:[%s3] sm:$0xf]
    %v111 = vld [vmem:[%s3 + $0x4] sm:$0xf]
    %v112 = vld [vmem:[%s3 + $0x8] sm:$0xf]
    %v113 = vld [vmem:[%s3 + $0xc] sm:$0xf]
    %v114 = vld [vmem:[%s3 + $0x10] sm:$0xf]
    %v115 = vld [vmem:[%s3 + $0x14] sm:$0xf]
    %v116 = vld [vmem:[%s3 + $0x18] sm:$0xf]
    %v117 = vld [vmem:[%s3 + $0x1c] sm:$0xf]
    %v118 = vld [vmem:[%s4] sm:$0x1]
    %v119 = vpack.c.bf16 %v109, %v109
    %v121 = vlaneseq
    %v122 = vshrl.u32 %v121, 7
    %v123 = vsub.s32 0, %v122
    %v124 = vrot.slane %v118, %v123
    %v134 = vunpack.c.l.b16 %v110
    %v135 = vunpack.c.l.b16 %v111
    %v136 = vunpack.c.l.b16 %v112
    %v137 = vunpack.c.l.b16 %v113
    %v138 = vunpack.c.l.b16 %v114
    %v139 = vunpack.c.l.b16 %v115
    %v140 = vunpack.c.l.b16 %v116
    %v141 = vunpack.c.l.b16 %v117
    %v142 = vpack.c.b16 %v135, %v134
    %v143 = vpack.c.b16 %v137, %v136
    %v144 = vpack.c.b16 %v139, %v138
    %v145 = vpack.c.b16 %v141, %v140
    %vm150 = vcmask 523264
    %v152 = vsel %vm150, %v119, 0
    %154 = vmatprep.subr.bf16.mxu0 0
    %155 = vmatpush1.bf16.msra.mxu0 %v142
    %156 = vmatprep.subr.bf16.mxu0 0
    %157 = vmatpush1.bf16.msra.mxu0 %v143
    %158 = vmatprep.subr.bf16.mxu0 0
    %159 = vmatpush1.bf16.msra.mxu0 %v144
    %160 = vmatprep.subr.bf16.mxu0 0
    %161 = vmatpush1.bf16.msra.mxu0 %v145
    %162 = vmatprep.subr.bf16.mxu0 0
    %163 = vmatpush1.bf16.msra.mxu0 0
    %164 = vmatprep.subr.bf16.mxu0 0
    %165 = vmatpush1.bf16.msra.mxu0 0
    %166 = vmatprep.subr.bf16.mxu0 0
    %167 = vmatpush1.bf16.msra.mxu0 0
    %168 = vmatprep.subr.bf16.mxu0 0
    %169 = vmatpush1.bf16.msra.mxu0 0
    %170 = vmatprep.subr.bf16.mxu0 0
    %171 = vmatpush1.bf16.msra.mxu0 0
    %172 = vmatprep.subr.bf16.mxu0 0
    %173 = vmatpush1.bf16.msra.mxu0 0
    %174 = vmatprep.subr.bf16.mxu0 0
    %175 = vmatpush1.bf16.msra.mxu0 0
    %176 = vmatprep.subr.bf16.mxu0 0
    %177 = vmatpush1.bf16.msra.mxu0 0
    %178 = vmatprep.subr.bf16.mxu0 0
    %179 = vmatpush1.bf16.msra.mxu0 0
    %180 = vmatprep.subr.bf16.mxu0 0
    %181 = vmatpush1.bf16.msra.mxu0 0
    %182 = vmatprep.subr.bf16.mxu0 0
    %183 = vmatpush1.bf16.msra.mxu0 0
    %184 = vmatprep.subr.bf16.mxu0 0
    %185 = vmatpush1.bf16.msra.mxu0 0
    %186 = vmatprep.mubr.bf16.mxu0 0
    %187 = vmatmul.mubr.bf16.gmra.mrb[0].mxu0 %v152
    %v188 = vpop.f32.mrb[0].mxu0
    %v189 = vadd.f32 %v124, %v188
    %v190 = vpop.f32.mrb[0].mxu0
    %v191 = vpop.f32.mrb[0].mxu0
    %v192 = vpop.f32.mrb[0].mxu0
    %193 = vdwg.mxu0
    %v194 = vmax.f32 %v189, 0.0
    %v195 = vld [vmem:[%s5] sm:$0xf]
    %v196 = vld [vmem:[%s5 + $0x4] sm:$0xf]
    %v197 = vld [vmem:[%s5 + $0x8] sm:$0xf]
    %v198 = vld [vmem:[%s5 + $0xc] sm:$0xf]
    %v199 = vld [vmem:[%s5 + $0x10] sm:$0xf]
    %v200 = vld [vmem:[%s5 + $0x14] sm:$0xf]
    %v201 = vld [vmem:[%s5 + $0x18] sm:$0xf]
    %v202 = vld [vmem:[%s5 + $0x1c] sm:$0xf]
    %v203 = vld [vmem:[%s6] sm:$0x1]
    %v204 = vpack.c.bf16 %v194, %v194
    %v206 = vlaneseq
    %v207 = vshrl.u32 %v206, 7
    %v208 = vsub.s32 0, %v207
    %v209 = vrot.slane %v203, %v208
    %v219 = vunpack.c.l.b16 %v195
    %v220 = vunpack.c.l.b16 %v196
    %v221 = vunpack.c.l.b16 %v197
    %v222 = vunpack.c.l.b16 %v198
    %v223 = vunpack.c.l.b16 %v199
    %v224 = vunpack.c.l.b16 %v200
    %v225 = vunpack.c.l.b16 %v201
    %v226 = vunpack.c.l.b16 %v202
    %v227 = vpack.c.b16 %v220, %v219
    %v228 = vpack.c.b16 %v222, %v221
    %v229 = vpack.c.b16 %v224, %v223
    %v230 = vpack.c.b16 %v226, %v225
    %v236 = vsel %vm150, %v204, 0
    %238 = vmatprep.subr.bf16.mxu0 0
    %239 = vmatpush1.bf16.msra.mxu0 %v227
    %240 = vmatprep.subr.bf16.mxu0 0
    %241 = vmatpush1.bf16.msra.mxu0 %v228
    %242 = vmatprep.subr.bf16.mxu0 0
    %243 = vmatpush1.bf16.msra.mxu0 %v229
    %244 = vmatprep.subr.bf16.mxu0 0
    %245 = vmatpush1.bf16.msra.mxu0 %v230
    %246 = vmatprep.subr.bf16.mxu0 0
    %247 = vmatpush1.bf16.msra.mxu0 0
    %248 = vmatprep.subr.bf16.mxu0 0
    %249 = vmatpush1.bf16.msra.mxu0 0
    %250 = vmatprep.subr.bf16.mxu0 0
    %251 = vmatpush1.bf16.msra.mxu0 0
    %252 = vmatprep.subr.bf16.mxu0 0
    %253 = vmatpush1.bf16.msra.mxu0 0
    %254 = vmatprep.subr.bf16.mxu0 0
    %255 = vmatpush1.bf16.msra.mxu0 0
    %256 = vmatprep.subr.bf16.mxu0 0
    %257 = vmatpush1.bf16.msra.mxu0 0
    %258 = vmatprep.subr.bf16.mxu0 0
    %259 = vmatpush1.bf16.msra.mxu0 0
    %260 = vmatprep.subr.bf16.mxu0 0
    %261 = vmatpush1.bf16.msra.mxu0 0
    %262 = vmatprep.subr.bf16.mxu0 0
    %263 = vmatpush1.bf16.msra.mxu0 0
    %264 = vmatprep.subr.bf16.mxu0 0
    %265 = vmatpush1.bf16.msra.mxu0 0
    %266 = vmatprep.subr.bf16.mxu0 0
    %267 = vmatpush1.bf16.msra.mxu0 0
    %268 = vmatprep.subr.bf16.mxu0 0
    %269 = vmatpush1.bf16.msra.mxu0 0
    %270 = vmatprep.mubr.bf16.mxu0 0
    %271 = vmatmul.mubr.bf16.gmra.mrb[0].mxu0 %v236
    %v272 = vpop.f32.mrb[0].mxu0
    %v273 = vadd.f32 %v209, %v272
    %v274 = vpop.f32.mrb[0].mxu0
    %v275 = vpop.f32.mrb[0].mxu0
    %v276 = vpop.f32.mrb[0].mxu0
    %277 = vdwg.mxu0
    %vm278 = vcmask 130048
    %v279 = vsel %vm278, %v273, -inf
    %280 = vmax.xlane.f32.xlu0 %v279
    %v281 = vpop.xlane.xlu0 %280
    %v282 = vsub.f32 %v273, %v281
    %v283 = vmul.f32 %v282, 1.442695
    %v284 = vpow.pop %v283
    %v285 = vsel %vm278, %v284, 0.0
    %286 = vadd.xlane.f32.xlu0 %v285
    %v287 = vpop.xlane.xlu0 %286
    %v288 = vlog2.pop %v287
    %v289 = vmul.f32 %v288, 0.6931472
    %v290 = vsub.f32 %v282, %v289
    %291 = vst.msk [vmem:[#allocation5] sm:$0xff] %vm278, %v290
    // Predicated region
    $region34: #{neural_network_forward.1} parent=1 // pred_check
      _
    $region35: #{neural_network_forward.1} parent=1 // pred_check_branch
      %293 = sbr.rel (0) target = $region37
    $region36: #{neural_network_forward.1} parent=1 // pred_region
      %s295 = ssub.s32 128, 128
      %296 = vsyncadd [#allocation4], %s295
      %s298 = sshll.u32 [#allocation5], 4
      %s299 = int_to_ptr.vmem [resolvable:$true] %s298
      %301 = dma.vmem_to_hbm [thread:$0]  %s299, 128, %s7, [#allocation4]
    $region37: #{neural_network_forward.1} parent=1 // pred_fallthru
      _
    // Predicated region
    $region38: #{neural_network_forward.1} parent=1 // pred_check
      _
    $region39: #{neural_network_forward.1} parent=1 // pred_check_branch
      %303 = sbr.rel (0) target = $region41
    $region40: #{neural_network_forward.1} parent=1 // pred_region
      %304 = dma.done [#allocation4], 128
    $region41: #{neural_network_forward.1} parent=1 // pred_fallthru
      _
    %305 = vsyncpa [#allocation3], 1
    %306 = vsyncpa [#allocation4], 1

</llo_original>
